<compile_context>
chip_gen: v5e
topology: v5e:2x2
jax: 0.10.0
libtpu: 0.0.40
codegen_flags: <defaults>
</compile_context>

<pallas_src>
import jax
import jax.numpy as jnp
import numpy as np
from jax import lax
from jax.experimental import pallas as pl
from jax.experimental.pallas import tpu as pltpu

EPS_BN = 1e-5


# ----------------------------------------------------------------------------
# Fused kernel: whole BaselineNet forward (BN already folded into the Linears)
#   expr (B,E), mut (B,M), w1a (E,2H), w1b (M,2H), b1 (1,2H),
#   w2 (2H,H) [= s1*W2], b2 (1,H) [= b2 + t1@W2],
#   w3 (1,H)  [= s2*w3],  b3 (1,) SMEM scalar [= b3 + t2@w3]
# ----------------------------------------------------------------------------
def baseline_kernel(expr_ref, mut_ref, w1a_ref, w1b_ref, b1_ref,
                    w2_ref, b2_ref, w3_ref, b3_ref, o_ref):
    hi = lax.Precision.HIGHEST

    # --- Layer 1: Linear(total_dim, 2H) with the concat fused away, then ReLU.
    h = (jnp.dot(expr_ref[...], w1a_ref[...], precision=hi,
                 preferred_element_type=jnp.float32)
         + jnp.dot(mut_ref[...], w1b_ref[...], precision=hi,
                   preferred_element_type=jnp.float32)
         + b1_ref[...])
    h = jnp.maximum(h, 0.0)
    # BatchNorm1d(2H) (eval) folded into w2/b2; Dropout(0.3) identity in eval.

    # --- Layer 2: Linear(2H, H), then ReLU.
    h = jnp.dot(h, w2_ref[...], precision=hi,
                preferred_element_type=jnp.float32) + b2_ref[...]
    h = jnp.maximum(h, 0.0)
    # BatchNorm1d(H) (eval) folded into w3/b3; Dropout(0.2) identity in eval.

    # --- Layer 3: Linear(H, 1) as VPU multiply + XLU lane reduction.
    o_ref[...] = jnp.sum(h * w3_ref[...], axis=-1, keepdims=True) + b3_ref[0]


def baseline_net(expression_data, mutation_data, params, embedding_data=None):
    """Matches BaselineNet.forward: embedding_data is ignored."""
    del embedding_data
    B, E = expression_data.shape
    M = mutation_data.shape[1]
    H2 = params["w1a"].shape[1]
    H = params["w2"].shape[1]

    args = (expression_data, mutation_data,
            params["w1a"], params["w1b"], params["b1"],
            params["w2"], params["b2"], params["w3"], params["b3"])

    flops = 2 * B * (E + M) * H2 + 2 * B * H2 * H + 2 * B * H
    bytes_accessed = sum(int(np.prod(a.shape)) * a.dtype.itemsize for a in args) + B * 4

    in_specs = (
        [pl.BlockSpec(memory_space=pltpu.MemorySpace.VMEM)] * 8
        + [pl.BlockSpec(memory_space=pltpu.MemorySpace.SMEM)]      # scalar b3
    )
    out = pl.pallas_call(
        baseline_kernel,
        out_shape=jax.ShapeDtypeStruct((B, 1), jnp.float32),
        in_specs=in_specs,
        out_specs=pl.BlockSpec(memory_space=pltpu.MemorySpace.VMEM),
        cost_estimate=pl.CostEstimate(flops=flops, transcendentals=0,
                                      bytes_accessed=bytes_accessed),
    )(*args)
    return out[:, 0]                                # .squeeze()


# ----------------------------------------------------------------------------
# Raw (PyTorch-style) parameter init and kernel-side parameter preparation
# ----------------------------------------------------------------------------
def init_raw_params(key, e_dim, m_dim, hidden):
    """Synthetic parameters mirroring the nn.Module at init (eval mode)."""
    h2 = 2 * hidden
    total = e_dim + m_dim
    ks = jax.random.split(key, 10)
    w1 = 0.1 * jax.random.normal(ks[0], (total, h2), jnp.float32)   # x @ W layout
    b1 = 0.05 * jax.random.normal(ks[1], (h2,), jnp.float32)
    g1 = 1.0 + 0.05 * jax.random.normal(ks[2], (h2,), jnp.float32)  # BN gamma
    be1 = 0.05 * jax.random.normal(ks[3], (h2,), jnp.float32)       # BN beta
    rm1 = jnp.zeros((h2,), jnp.float32)                             # running_mean
    rv1 = jnp.ones((h2,), jnp.float32)                              # running_var
    w2 = 0.1 * jax.random.normal(ks[4], (h2, hidden), jnp.float32)
    b2 = 0.05 * jax.random.normal(ks[5], (hidden,), jnp.float32)
    g2 = 1.0 + 0.05 * jax.random.normal(ks[6], (hidden,), jnp.float32)
    be2 = 0.05 * jax.random.normal(ks[7], (hidden,), jnp.float32)
    rm2 = jnp.zeros((hidden,), jnp.float32)
    rv2 = jnp.ones((hidden,), jnp.float32)
    w3 = 0.1 * jax.random.normal(ks[8], (hidden, 1), jnp.float32)
    b3 = 0.05 * jax.random.normal(ks[9], (1,), jnp.float32)
    return dict(w1=w1, b1=b1, g1=g1, be1=be1, rm1=rm1, rv1=rv1,
                w2=w2, b2=b2, g2=g2, be2=be2, rm2=rm2, rv2=rv2,
                w3=w3, b3=b3)


def prepare_params(raw, e_dim):
    """Fold eval-mode BatchNorm fully into the adjacent Linear layers (offline).

      BN1:  h -> s1*h + t1   folds into   W2' = s1[:,None]*W2,  b2' = b2 + t1@W2
      BN2:  h -> s2*h + t2   folds into   w3' = s2*w3,          b3' = b3 + t2@w3
    """
    hi = lax.Precision.HIGHEST
    s1 = raw["g1"] / jnp.sqrt(raw["rv1"] + EPS_BN)
    t1 = raw["be1"] - raw["rm1"] * s1
    s2 = raw["g2"] / jnp.sqrt(raw["rv2"] + EPS_BN)
    t2 = raw["be2"] - raw["rm2"] * s2

    w2f = raw["w2"] * s1[:, None]
    b2f = raw["b2"] + jnp.dot(t1, raw["w2"], precision=hi)
    w3v = raw["w3"][:, 0] * s2
    b3f = raw["b3"][0] + jnp.dot(t2, raw["w3"][:, 0], precision=hi)

    return dict(
        w1a=raw["w1"][:e_dim],                    # (E, 2H)
        w1b=raw["w1"][e_dim:],                    # (M, 2H)
        b1=raw["b1"].reshape(1, -1),              # (1, 2H)
        w2=w2f,                                   # (2H, H)  BN1 folded in
        b2=b2f.reshape(1, -1),                    # (1,  H)  BN1 folded in
        w3=w3v.reshape(1, -1),                    # (1,  H)  BN2 folded in
        b3=jnp.reshape(b3f, (1,)).astype(jnp.float32),   # SMEM scalar, BN2 folded in
    )


# ----------------------------------------------------------------------------
# Pure-JAX reference (uses the raw, un-folded parameters)
# ----------------------------------------------------------------------------
def reference_forward(expr, mut, raw):
    hi = lax.Precision.HIGHEST
    x = jnp.concatenate([expr, mut], axis=1)
    h = jnp.dot(x, raw["w1"], precision=hi) + raw["b1"]
    h = jnp.maximum(h, 0.0)
    h = (h - raw["rm1"]) / jnp.sqrt(raw["rv1"] + EPS_BN) * raw["g1"] + raw["be1"]
    h = jnp.dot(h, raw["w2"], precision=hi) + raw["b2"]
    h = jnp.maximum(h, 0.0)
    h = (h - raw["rm2"]) / jnp.sqrt(raw["rv2"] + EPS_BN) * raw["g2"] + raw["be2"]
    out = jnp.dot(h, raw["w3"], precision=hi) + raw["b3"]
    return out[:, 0]


if __name__ == "__main__":
    B, E_DIM, M_DIM, HIDDEN = 8, 16, 12, 32

    root = jax.random.PRNGKey(0)
    k_in, k_par = jax.random.split(root)
    ke, km = jax.random.split(k_in)
    expression = jax.random.normal(ke, (B, E_DIM), jnp.float32)
    mutation = jax.random.normal(km, (B, M_DIM), jnp.float32)

    raw = init_raw_params(k_par, E_DIM, M_DIM, HIDDEN)
    params = prepare_params(raw, E_DIM)

    fwd = jax.jit(lambda e, m: baseline_net(e, m, params))
    out = jax.block_until_ready(fwd(expression, mutation))

    ref = jax.block_until_ready(reference_forward(expression, mutation, raw))
    assert out.shape == (B,)
    np.testing.assert_allclose(np.asarray(out), np.asarray(ref),
                               rtol=1e-5, atol=1e-5)

    print("KERNEL_OK")
</pallas_src>

<mosaic_0001>
module attributes {stable_mosaic.version = 11 : i64} {
  func.func @baseline_kernel(%arg0: memref<8x16xf32, #tpu.memory_space<vmem>>, %arg1: memref<8x12xf32, #tpu.memory_space<vmem>>, %arg2: memref<16x64xf32, #tpu.memory_space<vmem>>, %arg3: memref<12x64xf32, #tpu.memory_space<vmem>>, %arg4: memref<1x64xf32, #tpu.memory_space<vmem>>, %arg5: memref<64x32xf32, #tpu.memory_space<vmem>>, %arg6: memref<1x32xf32, #tpu.memory_space<vmem>>, %arg7: memref<1x32xf32, #tpu.memory_space<vmem>>, %arg8: memref<1xf32, #tpu.memory_space<smem>>, %arg9: memref<8x1xf32, #tpu.memory_space<vmem>>) attributes {dimension_semantics = [], scalar_prefetch = 0 : i64, scratch_operands = 0 : i64, tpu.core_type = #tpu.core_type<tc>} {
    %c0 = arith.constant 0 : index
    %c0_0 = arith.constant 0 : index
    %0 = vector.load %arg0[%c0, %c0_0] : memref<8x16xf32, #tpu.memory_space<vmem>>, vector<8x16xf32>
    %c0_1 = arith.constant 0 : index
    %c0_2 = arith.constant 0 : index
    %1 = vector.load %arg2[%c0_1, %c0_2] : memref<16x64xf32, #tpu.memory_space<vmem>>, vector<16x64xf32>
    %cst = arith.constant dense<0.000000e+00> : vector<8x64xf32>
    %2 = tpu.matmul %0, %1, %cst {dimension_numbers = #tpu.dot_dimension_numbers<[1], [0], [0], [1], [0, 0, 1, 1], [], []>, precision = #tpu.contract_precision<fp32>} : vector<8x16xf32>, vector<16x64xf32>, vector<8x64xf32> -> vector<8x64xf32>
    %c0_3 = arith.constant 0 : index
    %c0_4 = arith.constant 0 : index
    %3 = vector.load %arg1[%c0_3, %c0_4] : memref<8x12xf32, #tpu.memory_space<vmem>>, vector<8x12xf32>
    %c0_5 = arith.constant 0 : index
    %c0_6 = arith.constant 0 : index
    %4 = vector.load %arg3[%c0_5, %c0_6] : memref<12x64xf32, #tpu.memory_space<vmem>>, vector<12x64xf32>
    %cst_7 = arith.constant dense<0.000000e+00> : vector<8x64xf32>
    %5 = tpu.matmul %3, %4, %cst_7 {dimension_numbers = #tpu.dot_dimension_numbers<[1], [0], [0], [1], [0, 0, 1, 1], [], []>, precision = #tpu.contract_precision<fp32>} : vector<8x12xf32>, vector<12x64xf32>, vector<8x64xf32> -> vector<8x64xf32>
    %6 = arith.addf %2, %5 : vector<8x64xf32>
    %c0_8 = arith.constant 0 : index
    %c0_9 = arith.constant 0 : index
    %7 = vector.load %arg4[%c0_8, %c0_9] : memref<1x64xf32, #tpu.memory_space<vmem>>, vector<1x64xf32>
    %8 = vector.broadcast %7 : vector<1x64xf32> to vector<8x64xf32>
    %9 = arith.addf %6, %8 : vector<8x64xf32>
    %cst_10 = arith.constant 0.000000e+00 : f32
    %10 = vector.broadcast %cst_10 : f32 to vector<8x64xf32>
    %11 = arith.maximumf %9, %10 : vector<8x64xf32>
    %c0_11 = arith.constant 0 : index
    %c0_12 = arith.constant 0 : index
    %12 = vector.load %arg5[%c0_11, %c0_12] : memref<64x32xf32, #tpu.memory_space<vmem>>, vector<64x32xf32>
    %cst_13 = arith.constant dense<0.000000e+00> : vector<8x32xf32>
    %13 = tpu.matmul %11, %12, %cst_13 {dimension_numbers = #tpu.dot_dimension_numbers<[1], [0], [0], [1], [0, 0, 1, 1], [], []>, precision = #tpu.contract_precision<fp32>} : vector<8x64xf32>, vector<64x32xf32>, vector<8x32xf32> -> vector<8x32xf32>
    %c0_14 = arith.constant 0 : index
    %c0_15 = arith.constant 0 : index
    %14 = vector.load %arg6[%c0_14, %c0_15] : memref<1x32xf32, #tpu.memory_space<vmem>>, vector<1x32xf32>
    %15 = vector.broadcast %14 : vector<1x32xf32> to vector<8x32xf32>
    %16 = arith.addf %13, %15 : vector<8x32xf32>
    %cst_16 = arith.constant 0.000000e+00 : f32
    %17 = vector.broadcast %cst_16 : f32 to vector<8x32xf32>
    %18 = arith.maximumf %16, %17 : vector<8x32xf32>
    %c0_17 = arith.constant 0 : index
    %c0_18 = arith.constant 0 : index
    %19 = vector.load %arg7[%c0_17, %c0_18] : memref<1x32xf32, #tpu.memory_space<vmem>>, vector<1x32xf32>
    %20 = vector.broadcast %19 : vector<1x32xf32> to vector<8x32xf32>
    %21 = arith.mulf %18, %20 : vector<8x32xf32>
    %cst_19 = arith.constant dense<0.000000e+00> : vector<8xf32>
    %22 = vector.multi_reduction <add>, %21, %cst_19 [1] : vector<8x32xf32> to vector<8xf32>
    %23 = vector.shape_cast %22 : vector<8xf32> to vector<8x1xf32>
    %c0_20 = arith.constant 0 : index
    %24 = memref.load %arg8[%c0_20] : memref<1xf32, #tpu.memory_space<smem>>
    %25 = vector.broadcast %24 : f32 to vector<8x1xf32>
    %26 = arith.addf %23, %25 : vector<8x1xf32>
    %c0_21 = arith.constant 0 : index
    %c0_22 = arith.constant 0 : index
    %27 = vector.load %arg9[%c0_21, %c0_22] : memref<8x1xf32, #tpu.memory_space<vmem>>, vector<8x1xf32>
    tpu.vector_store %arg9[%c0_21, %c0_22], %26 {strides = array<i32>} : memref<8x1xf32, #tpu.memory_space<vmem>>, vector<8x1xf32>,
    return
  }
}

</mosaic_0001>

<llo_original>
// kernel: _lambda_.1
$region0: #{_lambda_.1}
  #allocation0 [shape = 'u32[]', space=smem, size = 0x4, offset = 0x4, fixed_abs, tag = 'smem constant byte address 0x4 - core index']
  #allocation1 [shape = 'u32[72,128]{1,0:T(1,128)}', space=vmem, size = 0x9000, scoped, tag = 'internal scratch']
  #allocation2 [shape = 'f32[1]{0:T(128)S(6)}', space=smem, size = 0x200, scoped, tag = 'scoped memory for _lambda_.1']
  %s0 = inlined_call_operand.hbm [shape: f32[8,16], index: 0, kind: input, shape index: {}]
  %s1 = inlined_call_operand.hbm [shape: f32[8,12], index: 1, kind: input, shape index: {}]
  %s2 = inlined_call_operand.hbm [shape: f32[16,64], index: 2, kind: input, shape index: {}]
  %s3 = inlined_call_operand.hbm [shape: f32[12,64], index: 3, kind: input, shape index: {}]
  %s4 = inlined_call_operand.vmem [shape: f32[1,64], index: 4, kind: input, shape index: {}]
  %s5 = inlined_call_operand.hbm [shape: f32[64,32], index: 5, kind: input, shape index: {}]
  %s6 = inlined_call_operand.vmem [shape: f32[1,32], index: 6, kind: input, shape index: {}]
  %s7 = inlined_call_operand.vmem [shape: f32[1,32], index: 7, kind: input, shape index: {}]
  %s8 = inlined_call_operand.<no memory space> [shape: f32[1], index: 8, kind: input, shape index: {}]
  %s9 = inlined_call_operand.vmem [shape: f32[8,1], index: 9, kind: output, shape index: {}]
  %s10 = sld [smem:[#allocation0]]
  $region66: #{_lambda_.1} parent=0
    _
  %s12 = ssub.s32 1, %s10
  %s13 = scalar_select 0, %s12, %s10
  %14 = sst [smem:[#allocation2]] %s8
  $region1: #{_lambda_.1} parent=0
    #allocation3 [shape = 'u8[4096]{0}', space=vmem, size = 0x1000, scoped, tag = 'input window, operand 0, single buffered']
    #allocation4 [shape = 's32[1]{0}', space=sflag, size = 0x4, scoped, tag = 'scoped memory for _lambda_.1']
    #allocation5 [shape = 'u8[4096]{0}', space=vmem, size = 0x1000, scoped, tag = 'input window, operand 1, single buffered']
    #allocation6 [shape = 's32[1]{0}', space=sflag, size = 0x4, scoped, tag = 'scoped memory for _lambda_.1']
    #allocation7 [shape = 'u8[8192]{0}', space=vmem, size = 0x2000, scoped, tag = 'input window, operand 2, single buffered']
    #allocation8 [shape = 'u8[8192]{0}', space=vmem, size = 0x2000, scoped, tag = 'input window, operand 3, single buffered']
    #allocation9 [shape = 's32[1]{0}', space=sflag, size = 0x4, scoped, tag = 'scoped memory for _lambda_.1']
    #allocation10 [shape = 'u8[32768]{0}', space=vmem, size = 0x8000, scoped, tag = 'input window, operand 5, single buffered']
    %15 = vsyncpa [#allocation4], 0
    %16 = vsyncpa [#allocation6], 0
    %17 = vsyncpa [#allocation9], 0
    // Predicated region
    $region2: #{_lambda_.1} parent=1 // pred_check
      _
    $region3: #{_lambda_.1} parent=1 // pred_check_branch
      %19 = sbr.rel (0) target = $region5
    $region4: #{_lambda_.1} parent=1 // pred_region
      %21 = vsyncadd [#allocation4], 0
      %s23 = sshll.u32 %s0, 4
      %s24 = int_to_ptr.hbm [resolvable:$true] %s23
      %s25 = sshll.u32 [#allocation3], 4
      %s26 = int_to_ptr.vmem [resolvable:$true] %s25
      %28 = dma.hbm_to_vmem [thread:$0]  %s24, 128, %s26, [#allocation4]
    $region5: #{_lambda_.1} parent=1 // pred_fallthru
      _
    // Predicated region
    $region6: #{_lambda_.1} parent=1 // pred_check
      _
    $region7: #{_lambda_.1} parent=1 // pred_check_branch
      %30 = sbr.rel (0) target = $region9
    $region8: #{_lambda_.1} parent=1 // pred_region
      %32 = vsyncadd [#allocation6], 0
      %s34 = sshll.u32 %s1, 4
      %s35 = int_to_ptr.hbm [resolvable:$true] %s34
      %s36 = sshll.u32 [#allocation5], 4
      %s37 = int_to_ptr.vmem [resolvable:$true] %s36
      %39 = dma.hbm_to_vmem [thread:$0]  %s35, 128, %s37, [#allocation6]
    $region9: #{_lambda_.1} parent=1 // pred_fallthru
      _
    // Predicated region
    $region10: #{_lambda_.1} parent=1 // pred_check
      _
    $region11: #{_lambda_.1} parent=1 // pred_check_branch
      %41 = sbr.rel (0) target = $region13
    $region12: #{_lambda_.1} parent=1 // pred_region
      %43 = vsyncadd [#allocation6], 0
      %s44 = sshll.u32 %s2, 4
      %s45 = int_to_ptr.hbm [resolvable:$true] %s44
      %s46 = sshll.u32 [#allocation7], 4
      %s47 = int_to_ptr.vmem [resolvable:$true] %s46
      %52 = dma.hbm_to_vmem [thread:$0]  %s45, 256, %s47, [#allocation6], 128, 128, 8
    $region13: #{_lambda_.1} parent=1 // pred_fallthru
      _
    // Predicated region
    $region14: #{_lambda_.1} parent=1 // pred_check
      _
    $region15: #{_lambda_.1} parent=1 // pred_check_branch
      %54 = sbr.rel (0) target = $region17
    $region16: #{_lambda_.1} parent=1 // pred_region
      %56 = vsyncadd [#allocation9], 0
      %s57 = sshll.u32 %s3, 4
      %s58 = int_to_ptr.hbm [resolvable:$true] %s57
      %s59 = sshll.u32 [#allocation8], 4
      %s60 = int_to_ptr.vmem [resolvable:$true] %s59
      %65 = dma.hbm_to_vmem [thread:$0]  %s58, 256, %s60, [#allocation9], 128, 128, 8
    $region17: #{_lambda_.1} parent=1 // pred_fallthru
      _
    // Predicated region
    $region18: #{_lambda_.1} parent=1 // pred_check
      _
    $region19: #{_lambda_.1} parent=1 // pred_check_branch
      %67 = sbr.rel (0) target = $region21
    $region20: #{_lambda_.1} parent=1 // pred_region
      _
    $region21: #{_lambda_.1} parent=1 // pred_fallthru
      _
    // Predicated region
    $region22: #{_lambda_.1} parent=1 // pred_check
      _
    $region23: #{_lambda_.1} parent=1 // pred_check_branch
      %69 = sbr.rel (0) target = $region25
    $region24: #{_lambda_.1} parent=1 // pred_region
      %71 = vsyncadd [#allocation9], 0
      %s72 = sshll.u32 %s5, 4
      %s73 = int_to_ptr.hbm [resolvable:$true] %s72
      %s74 = sshll.u32 [#allocation10], 4
      %s75 = int_to_ptr.vmem [resolvable:$true] %s74
      %80 = dma.hbm_to_vmem [thread:$0]  %s73, 1024, %s75, [#allocation9], 128, 128, 8
    $region25: #{_lambda_.1} parent=1 // pred_fallthru
      _
    // Predicated region
    $region26: #{_lambda_.1} parent=1 // pred_check
      _
    $region27: #{_lambda_.1} parent=1 // pred_check_branch
      %82 = sbr.rel (0) target = $region29
    $region28: #{_lambda_.1} parent=1 // pred_region
      _
    $region29: #{_lambda_.1} parent=1 // pred_fallthru
      _
    // Predicated region
    $region30: #{_lambda_.1} parent=1 // pred_check
      _
    $region31: #{_lambda_.1} parent=1 // pred_check_branch
      %84 = sbr.rel (0) target = $region33
    $region32: #{_lambda_.1} parent=1 // pred_region
      _
    $region33: #{_lambda_.1} parent=1 // pred_fallthru
      _
    // Predicated region
    $region34: #{_lambda_.1} parent=1 // pred_check
      _
    $region35: #{_lambda_.1} parent=1 // pred_check_branch
      %86 = sbr.rel (0) target = $region37
    $region36: #{_lambda_.1} parent=1 // pred_region
      _
    $region37: #{_lambda_.1} parent=1 // pred_fallthru
      _
    // Predicated region
    $region38: #{_lambda_.1} parent=1 // pred_check
      _
    $region39: #{_lambda_.1} parent=1 // pred_check_branch
      %88 = sbr.rel (0) target = $region41
    $region40: #{_lambda_.1} parent=1 // pred_region
      %90 = dma.done [#allocation4], 128
    $region41: #{_lambda_.1} parent=1 // pred_fallthru
      _
    // Predicated region
    $region42: #{_lambda_.1} parent=1 // pred_check
      _
    $region43: #{_lambda_.1} parent=1 // pred_check_branch
      %92 = sbr.rel (0) target = $region45
    $region44: #{_lambda_.1} parent=1 // pred_region
      %94 = dma.done [#allocation6], 128
    $region45: #{_lambda_.1} parent=1 // pred_fallthru
      _
    // Predicated region
    $region46: #{_lambda_.1} parent=1 // pred_check
      _
    $region47: #{_lambda_.1} parent=1 // pred_check_branch
      %96 = sbr.rel (0) target = $region49
    $region48: #{_lambda_.1} parent=1 // pred_region
      %98 = dma.done [#allocation6], 256
    $region49: #{_lambda_.1} parent=1 // pred_fallthru
      _
    // Predicated region
    $region50: #{_lambda_.1} parent=1 // pred_check
      _
    $region51: #{_lambda_.1} parent=1 // pred_check_branch
      %100 = sbr.rel (0) target = $region53
    $region52: #{_lambda_.1} parent=1 // pred_region
      %102 = dma.done [#allocation9], 256
    $region53: #{_lambda_.1} parent=1 // pred_fallthru
      _
    // Predicated region
    $region54: #{_lambda_.1} parent=1 // pred_check
      _
    $region55: #{_lambda_.1} parent=1 // pred_check_branch
      %104 = sbr.rel (0) target = $region57
    $region56: #{_lambda_.1} parent=1 // pred_region
      %106 = dma.done [#allocation9], 1024
    $region57: #{_lambda_.1} parent=1 // pred_fallthru
      _
    %v107 = vld [vmem:[#allocation3] sm:$0xff]
    %v108 = vld [vmem:[#allocation7] sm:$0xff]
    %v109 = vld [vmem:[#allocation7 + $0x8] sm:$0xff]
    %v110 = vld [vmem:[#allocation5] sm:$0xff]
    %v111 = vld [vmem:[#allocation8] sm:$0xff]
    %v112 = vld [vmem:[#allocation8 + $0x8] sm:$0xf]
    %vm113 = vcmask 97280
    %v115 = vsel %vm113, %v110, 0
    %vm117 = vcmask 1043456
    %v119 = vsel %vm117, %v112, 0
    %121 = vmatpush.msra.mxu0 0.0
    %122 = vmatpush.msra.mxu0 0.0
    %123 = vmatpush.msra.mxu0 0.0
    %124 = vmatpush.msra.mxu0 0.0
    %125 = vmatpush.msra.mxu0 0.0
    %126 = vmatpush.msra.mxu0 0.0
    %127 = vmatpush.msra.mxu0 0.0
    %128 = vmatpush.msra.mxu0 0.0
    %129 = vmatpush.msra.mxu0 0.0
    %130 = vmatpush.msra.mxu0 0.0
    %131 = vmatpush.msra.mxu0 0.0
    %132 = vmatpush.msra.mxu0 0.0
    %133 = vmatpush.msra.mxu0 0.0
    %134 = vmatpush.msra.mxu0 0.0
    %v135 = vand.u32 %v119, 4294901760
    %136 = vmatpush.msra.mxu0 %v135
    %v137 = vand.u32 %v111, 4294901760
    %138 = vmatpush.msra.mxu0 %v137
    %v139 = vand.u32 %v115, 4294901760
    %v140 = vsub.f32 %v115, %v139
    %v141 = vand.u32 %v140, 4294901760
    %v142 = vsub.f32 %v140, %v141
    %v143 = vand.u32 %v142, 4294901760
    %144 = vmatmul.f32.gmra.mxu0 %v143
    %v145 = vpop.f32.mrf.mxu0
    %v146 = vadd.f32 0.0, %v145
    %147 = vdwg.mxu0
    %148 = vmatpush.msra.mxu0 0.0
    %149 = vmatpush.msra.mxu0 0.0
    %150 = vmatpush.msra.mxu0 0.0
    %151 = vmatpush.msra.mxu0 0.0
    %152 = vmatpush.msra.mxu0 0.0
    %153 = vmatpush.msra.mxu0 0.0
    %154 = vmatpush.msra.mxu0 0.0
    %155 = vmatpush.msra.mxu0 0.0
    %156 = vmatpush.msra.mxu0 0.0
    %157 = vmatpush.msra.mxu0 0.0
    %158 = vmatpush.msra.mxu0 0.0
    %159 = vmatpush.msra.mxu0 0.0
    %160 = vmatpush.msra.mxu0 0.0
    %161 = vmatpush.msra.mxu0 0.0
    %v162 = vand.u32 %v119, 4294901760
    %v163 = vsub.f32 %v119, %v162
    %v164 = vand.u32 %v163, 4294901760
    %v165 = vsub.f32 %v163, %v164
    %v166 = vand.u32 %v165, 4294901760
    %167 = vmatpush.msra.mxu0 %v166
    %v168 = vand.u32 %v111, 4294901760
    %v169 = vsub.f32 %v111, %v168
    %v170 = vand.u32 %v169, 4294901760
    %v171 = vsub.f32 %v169, %v170
    %v172 = vand.u32 %v171, 4294901760
    %173 = vmatpush.msra.mxu0 %v172
    %v174 = vand.u32 %v115, 4294901760
    %175 = vmatmul.f32.gmra.mxu0 %v174
    %v176 = vpop.f32.mrf.mxu0
    %v177 = vadd.f32 %v146, %v176
    %178 = vdwg.mxu0
    %179 = vmatpush.msra.mxu0 0.0
    %180 = vmatpush.msra.mxu0 0.0
    %181 = vmatpush.msra.mxu0 0.0
    %182 = vmatpush.msra.mxu0 0.0
    %183 = vmatpush.msra.mxu0 0.0
    %184 = vmatpush.msra.mxu0 0.0
    %185 = vmatpush.msra.mxu0 0.0
    %186 = vmatpush.msra.mxu0 0.0
    %187 = vmatpush.msra.mxu0 0.0
    %188 = vmatpush.msra.mxu0 0.0
    %189 = vmatpush.msra.mxu0 0.0
    %190 = vmatpush.msra.mxu0 0.0
    %191 = vmatpush.msra.mxu0 0.0
    %192 = vmatpush.msra.mxu0 0.0
    %v193 = vand.u32 %v119, 4294901760
    %v194 = vsub.f32 %v119, %v193
    %195 = vmatpush.msra.mxu0 %v194
    %v196 = vand.u32 %v111, 4294901760
    %v197 = vsub.f32 %v111, %v196
    %198 = vmatpush.msra.mxu0 %v197
    %v199 = vand.u32 %v115, 4294901760
    %v200 = vsub.f32 %v115, %v199
    %201 = vmatmul.f32.gmra.mxu0 %v200
    %v202 = vpop.f32.mrf.mxu0
    %v203 = vadd.f32 %v177, %v202
    %204 = vdwg.mxu0
    %205 = vmatpush.msra.mxu0 0.0
    %206 = vmatpush.msra.mxu0 0.0
    %207 = vmatpush.msra.mxu0 0.0
    %208 = vmatpush.msra.mxu0 0.0
    %209 = vmatpush.msra.mxu0 0.0
    %210 = vmatpush.msra.mxu0 0.0
    %211 = vmatpush.msra.mxu0 0.0
    %212 = vmatpush.msra.mxu0 0.0
    %213 = vmatpush.msra.mxu0 0.0
    %214 = vmatpush.msra.mxu0 0.0
    %215 = vmatpush.msra.mxu0 0.0
    %216 = vmatpush.msra.mxu0 0.0
    %217 = vmatpush.msra.mxu0 0.0
    %218 = vmatpush.msra.mxu0 0.0
    %v219 = vand.u32 %v119, 4294901760
    %220 = vmatpush.msra.mxu0 %v219
    %v221 = vand.u32 %v111, 4294901760
    %222 = vmatpush.msra.mxu0 %v221
    %v223 = vand.u32 %v115, 4294901760
    %v224 = vsub.f32 %v115, %v223
    %v225 = vand.u32 %v224, 4294901760
    %226 = vmatmul.f32.gmra.mxu0 %v225
    %v227 = vpop.f32.mrf.mxu0
    %v228 = vadd.f32 %v203, %v227
    %229 = vdwg.mxu0
    %230 = vmatpush.msra.mxu0 0.0
    %231 = vmatpush.msra.mxu0 0.0
    %232 = vmatpush.msra.mxu0 0.0
    %233 = vmatpush.msra.mxu0 0.0
    %234 = vmatpush.msra.mxu0 0.0
    %235 = vmatpush.msra.mxu0 0.0
    %236 = vmatpush.msra.mxu0 0.0
    %237 = vmatpush.msra.mxu0 0.0
    %238 = vmatpush.msra.mxu0 0.0
    %239 = vmatpush.msra.mxu0 0.0
    %240 = vmatpush.msra.mxu0 0.0
    %241 = vmatpush.msra.mxu0 0.0
    %242 = vmatpush.msra.mxu0 0.0
    %243 = vmatpush.msra.mxu0 0.0
    %v244 = vand.u32 %v119, 4294901760
    %v245 = vsub.f32 %v119, %v244
    %v246 = vand.u32 %v245, 4294901760
    %247 = vmatpush.msra.mxu0 %v246
    %v248 = vand.u32 %v111, 4294901760
    %v249 = vsub.f32 %v111, %v248
    %v250 = vand.u32 %v249, 4294901760
    %251 = vmatpush.msra.mxu0 %v250
    %v252 = vand.u32 %v115, 4294901760
    %253 = vmatmul.f32.gmra.mxu0 %v252
    %v254 = vpop.f32.mrf.mxu0
    %v255 = vadd.f32 %v228, %v254
    %256 = vdwg.mxu0
    %257 = vmatpush.msra.mxu0 0.0
    %258 = vmatpush.msra.mxu0 0.0
    %259 = vmatpush.msra.mxu0 0.0
    %260 = vmatpush.msra.mxu0 0.0
    %261 = vmatpush.msra.mxu0 0.0
    %262 = vmatpush.msra.mxu0 0.0
    %263 = vmatpush.msra.mxu0 0.0
    %264 = vmatpush.msra.mxu0 0.0
    %265 = vmatpush.msra.mxu0 0.0
    %266 = vmatpush.msra.mxu0 0.0
    %267 = vmatpush.msra.mxu0 0.0
    %268 = vmatpush.msra.mxu0 0.0
    %269 = vmatpush.msra.mxu0 0.0
    %270 = vmatpush.msra.mxu0 0.0
    %v271 = vand.u32 %v119, 4294901760
    %272 = vmatpush.msra.mxu0 %v271
    %v273 = vand.u32 %v111, 4294901760
    %274 = vmatpush.msra.mxu0 %v273
    %v275 = vand.u32 %v115, 4294901760
    %276 = vmatmul.f32.gmra.mxu0 %v275
    %v277 = vpop.f32.mrf.mxu0
    %v278 = vadd.f32 %v255, %v277
    %279 = vdwg.mxu0
    %vm280 = vcmask 130048
    %v282 = vsel %vm280, %v107, 0
    %284 = vmatpush.msra.mxu0 0.0
    %285 = vmatpush.msra.mxu0 0.0
    %286 = vmatpush.msra.mxu0 0.0
    %287 = vmatpush.msra.mxu0 0.0
    %288 = vmatpush.msra.mxu0 0.0
    %289 = vmatpush.msra.mxu0 0.0
    %290 = vmatpush.msra.mxu0 0.0
    %291 = vmatpush.msra.mxu0 0.0
    %292 = vmatpush.msra.mxu0 0.0
    %293 = vmatpush.msra.mxu0 0.0
    %294 = vmatpush.msra.mxu0 0.0
    %295 = vmatpush.msra.mxu0 0.0
    %296 = vmatpush.msra.mxu0 0.0
    %297 = vmatpush.msra.mxu0 0.0
    %v298 = vand.u32 %v109, 4294901760
    %299 = vmatpush.msra.mxu0 %v298
    %v300 = vand.u32 %v108, 4294901760
    %301 = vmatpush.msra.mxu0 %v300
    %v302 = vand.u32 %v282, 4294901760
    %v303 = vsub.f32 %v282, %v302
    %v304 = vand.u32 %v303, 4294901760
    %v305 = vsub.f32 %v303, %v304
    %v306 = vand.u32 %v305, 4294901760
    %307 = vmatmul.f32.gmra.mxu0 %v306
    %v308 = vpop.f32.mrf.mxu0
    %v309 = vadd.f32 %v278, %v308
    %310 = vdwg.mxu0
    %311 = vmatpush.msra.mxu0 0.0
    %312 = vmatpush.msra.mxu0 0.0
    %313 = vmatpush.msra.mxu0 0.0
    %314 = vmatpush.msra.mxu0 0.0
    %315 = vmatpush.msra.mxu0 0.0
    %316 = vmatpush.msra.mxu0 0.0
    %317 = vmatpush.msra.mxu0 0.0
    %318 = vmatpush.msra.mxu0 0.0
    %319 = vmatpush.msra.mxu0 0.0
    %320 = vmatpush.msra.mxu0 0.0
    %321 = vmatpush.msra.mxu0 0.0
    %322 = vmatpush.msra.mxu0 0.0
    %323 = vmatpush.msra.mxu0 0.0
    %324 = vmatpush.msra.mxu0 0.0
    %v325 = vand.u32 %v109, 4294901760
    %v326 = vsub.f32 %v109, %v325
    %v327 = vand.u32 %v326, 4294901760
    %v328 = vsub.f32 %v326, %v327
    %v329 = vand.u32 %v328, 4294901760
    %330 = vmatpush.msra.mxu0 %v329
    %v331 = vand.u32 %v108, 4294901760
    %v332 = vsub.f32 %v108, %v331
    %v333 = vand.u32 %v332, 4294901760
    %v334 = vsub.f32 %v332, %v333
    %v335 = vand.u32 %v334, 4294901760
    %336 = vmatpush.msra.mxu0 %v335
    %v337 = vand.u32 %v282, 4294901760
    %338 = vmatmul.f32.gmra.mxu0 %v337
    %v339 = vpop.f32.mrf.mxu0
    %v340 = vadd.f32 %v309, %v339
    %341 = vdwg.mxu0
    %342 = vmatpush.msra.mxu0 0.0
    %343 = vmatpush.msra.mxu0 0.0
    %344 = vmatpush.msra.mxu0 0.0
    %345 = vmatpush.msra.mxu0 0.0
    %346 = vmatpush.msra.mxu0 0.0
    %347 = vmatpush.msra.mxu0 0.0
    %348 = vmatpush.msra.mxu0 0.0
    %349 = vmatpush.msra.mxu0 0.0
    %350 = vmatpush.msra.mxu0 0.0
    %351 = vmatpush.msra.mxu0 0.0
    %352 = vmatpush.msra.mxu0 0.0
    %353 = vmatpush.msra.mxu0 0.0
    %354 = vmatpush.msra.mxu0 0.0
    %355 = vmatpush.msra.mxu0 0.0
    %v356 = vand.u32 %v109, 4294901760
    %v357 = vsub.f32 %v109, %v356
    %358 = vmatpush.msra.mxu0 %v357
    %v359 = vand.u32 %v108, 4294901760
    %v360 = vsub.f32 %v108, %v359
    %361 = vmatpush.msra.mxu0 %v360
    %v362 = vand.u32 %v282, 4294901760
    %v363 = vsub.f32 %v282, %v362
    %364 = vmatmul.f32.gmra.mxu0 %v363
    %v365 = vpop.f32.mrf.mxu0
    %v366 = vadd.f32 %v340, %v365
    %367 = vdwg.mxu0
    %368 = vmatpush.msra.mxu0 0.0
    %369 = vmatpush.msra.mxu0 0.0
    %370 = vmatpush.msra.mxu0 0.0
    %371 = vmatpush.msra.mxu0 0.0
    %372 = vmatpush.msra.mxu0 0.0
    %373 = vmatpush.msra.mxu0 0.0
    %374 = vmatpush.msra.mxu0 0.0
    %375 = vmatpush.msra.mxu0 0.0
    %376 = vmatpush.msra.mxu0 0.0
    %377 = vmatpush.msra.mxu0 0.0
    %378 = vmatpush.msra.mxu0 0.0
    %379 = vmatpush.msra.mxu0 0.0
    %380 = vmatpush.msra.mxu0 0.0
    %381 = vmatpush.msra.mxu0 0.0
    %v382 = vand.u32 %v109, 4294901760
    %383 = vmatpush.msra.mxu0 %v382
    %v384 = vand.u32 %v108, 4294901760
    %385 = vmatpush.msra.mxu0 %v384
    %v386 = vand.u32 %v282, 4294901760
    %v387 = vsub.f32 %v282, %v386
    %v388 = vand.u32 %v387, 4294901760
    %389 = vmatmul.f32.gmra.mxu0 %v388
    %v390 = vpop.f32.mrf.mxu0
    %v391 = vadd.f32 %v366, %v390
    %392 = vdwg.mxu0
    %393 = vmatpush.msra.mxu0 0.0
    %394 = vmatpush.msra.mxu0 0.0
    %395 = vmatpush.msra.mxu0 0.0
    %396 = vmatpush.msra.mxu0 0.0
    %397 = vmatpush.msra.mxu0 0.0
    %398 = vmatpush.msra.mxu0 0.0
    %399 = vmatpush.msra.mxu0 0.0
    %400 = vmatpush.msra.mxu0 0.0
    %401 = vmatpush.msra.mxu0 0.0
    %402 = vmatpush.msra.mxu0 0.0
    %403 = vmatpush.msra.mxu0 0.0
    %404 = vmatpush.msra.mxu0 0.0
    %405 = vmatpush.msra.mxu0 0.0
    %406 = vmatpush.msra.mxu0 0.0
    %v407 = vand.u32 %v109, 4294901760
    %v408 = vsub.f32 %v109, %v407
    %v409 = vand.u32 %v408, 4294901760
    %410 = vmatpush.msra.mxu0 %v409
    %v411 = vand.u32 %v108, 4294901760
    %v412 = vsub.f32 %v108, %v411
    %v413 = vand.u32 %v412, 4294901760
    %414 = vmatpush.msra.mxu0 %v413
    %v415 = vand.u32 %v282, 4294901760
    %416 = vmatmul.f32.gmra.mxu0 %v415
    %v417 = vpop.f32.mrf.mxu0
    %v418 = vadd.f32 %v391, %v417
    %419 = vdwg.mxu0
    %420 = vmatpush.msra.mxu0 0.0
    %421 = vmatpush.msra.mxu0 0.0
    %422 = vmatpush.msra.mxu0 0.0
    %423 = vmatpush.msra.mxu0 0.0
    %424 = vmatpush.msra.mxu0 0.0
    %425 = vmatpush.msra.mxu0 0.0
    %426 = vmatpush.msra.mxu0 0.0
    %427 = vmatpush.msra.mxu0 0.0
    %428 = vmatpush.msra.mxu0 0.0
    %429 = vmatpush.msra.mxu0 0.0
    %430 = vmatpush.msra.mxu0 0.0
    %431 = vmatpush.msra.mxu0 0.0
    %432 = vmatpush.msra.mxu0 0.0
    %433 = vmatpush.msra.mxu0 0.0
    %v434 = vand.u32 %v109, 4294901760
    %435 = vmatpush.msra.mxu0 %v434
    %v436 = vand.u32 %v108, 4294901760
    %437 = vmatpush.msra.mxu0 %v436
    %v438 = vand.u32 %v282, 4294901760
    %439 = vmatmul.f32.gmra.mxu0 %v438
    %v440 = vpop.f32.mrf.mxu0
    %v441 = vadd.f32 %v418, %v440
    %442 = vdwg.mxu0
    %v443 = vld [vmem:[%s4] sm:$0x1]
    %v445 = vperm.slane %v443, 0
    %v447 = vadd.f32 %v441, %v445
    %v448 = vmax.f32 %v447, 0.0
    %v449 = vld [vmem:[#allocation10] sm:$0xff]
    %v450 = vld [vmem:[#allocation10 + $0x8] sm:$0xff]
    %v451 = vld [vmem:[#allocation10 + $0x10] sm:$0xff]
    %v452 = vld [vmem:[#allocation10 + $0x18] sm:$0xff]
    %v453 = vld [vmem:[#allocation10 + $0x20] sm:$0xff]
    %v454 = vld [vmem:[#allocation10 + $0x28] sm:$0xff]
    %v455 = vld [vmem:[#allocation10 + $0x30] sm:$0xff]
    %v456 = vld [vmem:[#allocation10 + $0x38] sm:$0xff]
    %v457 = vld [vmem:[%s6] sm:$0x1]
    %v459 = vperm.slane %v457, 0
    %vm461 = vcmask 523264
    %v463 = vsel %vm461, %v448, 0
    %465 = vmatpush.msra.mxu0 0.0
    %466 = vmatpush.msra.mxu0 0.0
    %467 = vmatpush.msra.mxu0 0.0
    %468 = vmatpush.msra.mxu0 0.0
    %469 = vmatpush.msra.mxu0 0.0
    %470 = vmatpush.msra.mxu0 0.0
    %471 = vmatpush.msra.mxu0 0.0
    %472 = vmatpush.msra.mxu0 0.0
    %v473 = vand.u32 %v456, 4294901760
    %474 = vmatpush.msra.mxu0 %v473
    %v475 = vand.u32 %v455, 4294901760
    %476 = vmatpush.msra.mxu0 %v475
    %v477 = vand.u32 %v454, 4294901760
    %478 = vmatpush.msra.mxu0 %v477
    %v479 = vand.u32 %v453, 4294901760
    %480 = vmatpush.msra.mxu0 %v479
    %v481 = vand.u32 %v452, 4294901760
    %482 = vmatpush.msra.mxu0 %v481
    %v483 = vand.u32 %v451, 4294901760
    %484 = vmatpush.msra.mxu0 %v483
    %v485 = vand.u32 %v450, 4294901760
    %486 = vmatpush.msra.mxu0 %v485
    %v487 = vand.u32 %v449, 4294901760
    %488 = vmatpush.msra.mxu0 %v487
    %v489 = vand.u32 %v463, 4294901760
    %v490 = vsub.f32 %v463, %v489
    %v491 = vand.u32 %v490, 4294901760
    %v492 = vsub.f32 %v490, %v491
    %v493 = vand.u32 %v492, 4294901760
    %494 = vmatmul.f32.gmra.mxu0 %v493
    %v495 = vpop.f32.mrf.mxu0
    %v496 = vadd.f32 %v459, %v495
    %497 = vdwg.mxu0
    %498 = vmatpush.msra.mxu0 0.0
    %499 = vmatpush.msra.mxu0 0.0
    %500 = vmatpush.msra.mxu0 0.0
    %501 = vmatpush.msra.mxu0 0.0
    %502 = vmatpush.msra.mxu0 0.0
    %503 = vmatpush.msra.mxu0 0.0
    %504 = vmatpush.msra.mxu0 0.0
    %505 = vmatpush.msra.mxu0 0.0
    %v506 = vand.u32 %v456, 4294901760
    %v507 = vsub.f32 %v456, %v506
    %v508 = vand.u32 %v507, 4294901760
    %v509 = vsub.f32 %v507, %v508
    %v510 = vand.u32 %v509, 4294901760
    %511 = vmatpush.msra.mxu0 %v510
    %v512 = vand.u32 %v455, 4294901760
    %v513 = vsub.f32 %v455, %v512
    %v514 = vand.u32 %v513, 4294901760
    %v515 = vsub.f32 %v513, %v514
    %v516 = vand.u32 %v515, 4294901760
    %517 = vmatpush.msra.mxu0 %v516
    %v518 = vand.u32 %v454, 4294901760
    %v519 = vsub.f32 %v454, %v518
    %v520 = vand.u32 %v519, 4294901760
    %v521 = vsub.f32 %v519, %v520
    %v522 = vand.u32 %v521, 4294901760
    %523 = vmatpush.msra.mxu0 %v522
    %v524 = vand.u32 %v453, 4294901760
    %v525 = vsub.f32 %v453, %v524
    %v526 = vand.u32 %v525, 4294901760
    %v527 = vsub.f32 %v525, %v526
    %v528 = vand.u32 %v527, 4294901760
    %529 = vmatpush.msra.mxu0 %v528
    %v530 = vand.u32 %v452, 4294901760
    %v531 = vsub.f32 %v452, %v530
    %v532 = vand.u32 %v531, 4294901760
    %v533 = vsub.f32 %v531, %v532
    %v534 = vand.u32 %v533, 4294901760
    %535 = vmatpush.msra.mxu0 %v534
    %v536 = vand.u32 %v451, 4294901760
    %v537 = vsub.f32 %v451, %v536
    %v538 = vand.u32 %v537, 4294901760
    %v539 = vsub.f32 %v537, %v538
    %v540 = vand.u32 %v539, 4294901760
    %541 = vmatpush.msra.mxu0 %v540
    %v542 = vand.u32 %v450, 4294901760
    %v543 = vsub.f32 %v450, %v542
    %v544 = vand.u32 %v543, 4294901760
    %v545 = vsub.f32 %v543, %v544
    %v546 = vand.u32 %v545, 4294901760
    %547 = vmatpush.msra.mxu0 %v546
    %v548 = vand.u32 %v449, 4294901760
    %v549 = vsub.f32 %v449, %v548
    %v550 = vand.u32 %v549, 4294901760
    %v551 = vsub.f32 %v549, %v550
    %v552 = vand.u32 %v551, 4294901760
    %553 = vmatpush.msra.mxu0 %v552
    %v554 = vand.u32 %v463, 4294901760
    %555 = vmatmul.f32.gmra.mxu0 %v554
    %v556 = vpop.f32.mrf.mxu0
    %v557 = vadd.f32 %v496, %v556
    %558 = vdwg.mxu0
    %559 = vmatpush.msra.mxu0 0.0
    %560 = vmatpush.msra.mxu0 0.0
    %561 = vmatpush.msra.mxu0 0.0
    %562 = vmatpush.msra.mxu0 0.0
    %563 = vmatpush.msra.mxu0 0.0
    %564 = vmatpush.msra.mxu0 0.0
    %565 = vmatpush.msra.mxu0 0.0
    %566 = vmatpush.msra.mxu0 0.0
    %v567 = vand.u32 %v456, 4294901760
    %v568 = vsub.f32 %v456, %v567
    %569 = vmatpush.msra.mxu0 %v568
    %v570 = vand.u32 %v455, 4294901760
    %v571 = vsub.f32 %v455, %v570
    %572 = vmatpush.msra.mxu0 %v571
    %v573 = vand.u32 %v454, 4294901760
    %v574 = vsub.f32 %v454, %v573
    %575 = vmatpush.msra.mxu0 %v574
    %v576 = vand.u32 %v453, 4294901760
    %v577 = vsub.f32 %v453, %v576
    %578 = vmatpush.msra.mxu0 %v577
    %v579 = vand.u32 %v452, 4294901760
    %v580 = vsub.f32 %v452, %v579
    %581 = vmatpush.msra.mxu0 %v580
    %v582 = vand.u32 %v451, 4294901760
    %v583 = vsub.f32 %v451, %v582
    %584 = vmatpush.msra.mxu0 %v583
    %v585 = vand.u32 %v450, 4294901760
    %v586 = vsub.f32 %v450, %v585
    %587 = vmatpush.msra.mxu0 %v586
    %v588 = vand.u32 %v449, 4294901760
    %v589 = vsub.f32 %v449, %v588
    %590 = vmatpush.msra.mxu0 %v589
    %v591 = vand.u32 %v463, 4294901760
    %v592 = vsub.f32 %v463, %v591
    %593 = vmatmul.f32.gmra.mxu0 %v592
    %v594 = vpop.f32.mrf.mxu0
    %v595 = vadd.f32 %v557, %v594
    %596 = vdwg.mxu0
    %597 = vmatpush.msra.mxu0 0.0
    %598 = vmatpush.msra.mxu0 0.0
    %599 = vmatpush.msra.mxu0 0.0
    %600 = vmatpush.msra.mxu0 0.0
    %601 = vmatpush.msra.mxu0 0.0
    %602 = vmatpush.msra.mxu0 0.0
    %603 = vmatpush.msra.mxu0 0.0
    %604 = vmatpush.msra.mxu0 0.0
    %v605 = vand.u32 %v456, 4294901760
    %606 = vmatpush.msra.mxu0 %v605
    %v607 = vand.u32 %v455, 4294901760
    %608 = vmatpush.msra.mxu0 %v607
    %v609 = vand.u32 %v454, 4294901760
    %610 = vmatpush.msra.mxu0 %v609
    %v611 = vand.u32 %v453, 4294901760
    %612 = vmatpush.msra.mxu0 %v611
    %v613 = vand.u32 %v452, 4294901760
    %614 = vmatpush.msra.mxu0 %v613
    %v615 = vand.u32 %v451, 4294901760
    %616 = vmatpush.msra.mxu0 %v615
    %v617 = vand.u32 %v450, 4294901760
    %618 = vmatpush.msra.mxu0 %v617
    %v619 = vand.u32 %v449, 4294901760
    %620 = vmatpush.msra.mxu0 %v619
    %v621 = vand.u32 %v463, 4294901760
    %v622 = vsub.f32 %v463, %v621
    %v623 = vand.u32 %v622, 4294901760
    %624 = vmatmul.f32.gmra.mxu0 %v623
    %v625 = vpop.f32.mrf.mxu0
    %v626 = vadd.f32 %v595, %v625
    %627 = vdwg.mxu0
    %628 = vmatpush.msra.mxu0 0.0
    %629 = vmatpush.msra.mxu0 0.0
    %630 = vmatpush.msra.mxu0 0.0
    %631 = vmatpush.msra.mxu0 0.0
    %632 = vmatpush.msra.mxu0 0.0
    %633 = vmatpush.msra.mxu0 0.0
    %634 = vmatpush.msra.mxu0 0.0
    %635 = vmatpush.msra.mxu0 0.0
    %v636 = vand.u32 %v456, 4294901760
    %v637 = vsub.f32 %v456, %v636
    %v638 = vand.u32 %v637, 4294901760
    %639 = vmatpush.msra.mxu0 %v638
    %v640 = vand.u32 %v455, 4294901760
    %v641 = vsub.f32 %v455, %v640
    %v642 = vand.u32 %v641, 4294901760
    %643 = vmatpush.msra.mxu0 %v642
    %v644 = vand.u32 %v454, 4294901760
    %v645 = vsub.f32 %v454, %v644
    %v646 = vand.u32 %v645, 4294901760
    %647 = vmatpush.msra.mxu0 %v646
    %v648 = vand.u32 %v453, 4294901760
    %v649 = vsub.f32 %v453, %v648
    %v650 = vand.u32 %v649, 4294901760
    %651 = vmatpush.msra.mxu0 %v650
    %v652 = vand.u32 %v452, 4294901760
    %v653 = vsub.f32 %v452, %v652
    %v654 = vand.u32 %v653, 4294901760
    %655 = vmatpush.msra.mxu0 %v654
    %v656 = vand.u32 %v451, 4294901760
    %v657 = vsub.f32 %v451, %v656
    %v658 = vand.u32 %v657, 4294901760
    %659 = vmatpush.msra.mxu0 %v658
    %v660 = vand.u32 %v450, 4294901760
    %v661 = vsub.f32 %v450, %v660
    %v662 = vand.u32 %v661, 4294901760
    %663 = vmatpush.msra.mxu0 %v662
    %v664 = vand.u32 %v449, 4294901760
    %v665 = vsub.f32 %v449, %v664
    %v666 = vand.u32 %v665, 4294901760
    %667 = vmatpush.msra.mxu0 %v666
    %v668 = vand.u32 %v463, 4294901760
    %669 = vmatmul.f32.gmra.mxu0 %v668
    %v670 = vpop.f32.mrf.mxu0
    %v671 = vadd.f32 %v626, %v670
    %672 = vdwg.mxu0
    %673 = vmatpush.msra.mxu0 0.0
    %674 = vmatpush.msra.mxu0 0.0
    %675 = vmatpush.msra.mxu0 0.0
    %676 = vmatpush.msra.mxu0 0.0
    %677 = vmatpush.msra.mxu0 0.0
    %678 = vmatpush.msra.mxu0 0.0
    %679 = vmatpush.msra.mxu0 0.0
    %680 = vmatpush.msra.mxu0 0.0
    %v681 = vand.u32 %v456, 4294901760
    %682 = vmatpush.msra.mxu0 %v681
    %v683 = vand.u32 %v455, 4294901760
    %684 = vmatpush.msra.mxu0 %v683
    %v685 = vand.u32 %v454, 4294901760
    %686 = vmatpush.msra.mxu0 %v685
    %v687 = vand.u32 %v453, 4294901760
    %688 = vmatpush.msra.mxu0 %v687
    %v689 = vand.u32 %v452, 4294901760
    %690 = vmatpush.msra.mxu0 %v689
    %v691 = vand.u32 %v451, 4294901760
    %692 = vmatpush.msra.mxu0 %v691
    %v693 = vand.u32 %v450, 4294901760
    %694 = vmatpush.msra.mxu0 %v693
    %v695 = vand.u32 %v449, 4294901760
    %696 = vmatpush.msra.mxu0 %v695
    %v697 = vand.u32 %v463, 4294901760
    %698 = vmatmul.f32.gmra.mxu0 %v697
    %v699 = vpop.f32.mrf.mxu0
    %v700 = vadd.f32 %v671, %v699
    %701 = vdwg.mxu0
    %v702 = vmax.f32 %v700, 0.0
    %v703 = vld [vmem:[%s7] sm:$0x1]
    %v705 = vperm.slane %v703, 0
    %v707 = vmul.f32 %v702, %v705
    %vm708 = vcmask 261120
    %v709 = vsel %vm708, %v707, 0.0
    %710 = vadd.xlane.f32.xlu0 %v709
    %v711 = vpop.xlane.xlu0 %710
    %s712 = sld [smem:[#allocation2]]
    %v713 = vstv %s712
    %v714 = vadd.f32 %v711, %v713
    %vm715 = vcmask 7168
    %716 = vst.msk [vmem:[%s9] sm:$0xff] %vm715, %v714
    // Predicated region
    $region58: #{_lambda_.1} parent=1 // pred_check
      _
    $region59: #{_lambda_.1} parent=1 // pred_check_branch
      %718 = sbr.rel (0) target = $region61
    $region60: #{_lambda_.1} parent=1 // pred_region
      _
    $region61: #{_lambda_.1} parent=1 // pred_fallthru
      _
    // Predicated region
    $region62: #{_lambda_.1} parent=1 // pred_check
      _
    $region63: #{_lambda_.1} parent=1 // pred_check_branch
      %720 = sbr.rel (0) target = $region65
    $region64: #{_lambda_.1} parent=1 // pred_region
      _
    $region65: #{_lambda_.1} parent=1 // pred_fallthru
      _
    %721 = vsyncpa [#allocation4], 1
    %722 = vsyncpa [#allocation6], 1
    %723 = vsyncpa [#allocation9], 1

</llo_original>
